<compile_context>
chip_gen: v7x
topology: tpu7x:2x2x1
jax: 0.10.0
libtpu: 0.0.40
codegen_flags: <defaults>
</compile_context>

<pallas_src>
import functools

import jax
import jax.numpy as jnp
from jax.experimental import pallas as pl
from jax.experimental.pallas import tpu as pltpu


def _round_up(v, m):
    return (v + m - 1) // m * m


def _make_tdnn_kernel(context_size, dilation, halo):
    K = context_size

    def tdnn_kernel(x_ref, xh_ref, w_ref, b_ref, o_ref):
        # x_ref : (tile_t, C_in)     bf16, rows [t*tile_t, (t+1)*tile_t)
        # xh_ref: (h_t, C_in)        bf16, next rows; first `halo` rows used
        # w_ref : (K*C_in, tile_co)  bf16, im2col weight (tap-major rows)
        # b_ref : (1, tile_co)       f32 bias
        # o_ref : (tile_t, tile_co)  output tile
        tile_t, c_in = x_ref.shape
        x_cur = x_ref[...]
        if halo > 0:
            x_full = jnp.concatenate([x_cur, xh_ref[...]], axis=0)
        else:
            x_full = x_cur

        # One dilated slice per context tap (static offsets).
        taps = [x_full[k * dilation:k * dilation + tile_t, :] for k in range(K)]

        if c_in < 128 and K > 1:
            # Small C_in: fuse the K taps into one deep matmul (im2col stack).
            x_stack = jnp.concatenate(taps, axis=1)                # (tile_t, K*C_in)
            acc = jnp.dot(x_stack, w_ref[...],
                          preferred_element_type=jnp.float32)
        else:
            # Wide C_in: per-tap matmuls already fill the MXU contraction.
            acc = jnp.dot(taps[0], w_ref[0:c_in, :],
                          preferred_element_type=jnp.float32)
            for k in range(1, K):
                acc = acc + jnp.dot(taps[k], w_ref[k * c_in:(k + 1) * c_in, :],
                                    preferred_element_type=jnp.float32)

        o_ref[...] = (acc + b_ref[...]).astype(o_ref.dtype)

    return tdnn_kernel


@functools.partial(jax.jit,
                   static_argnames=("context_size", "dilation", "tile_t", "tile_co"))
def tdnn_layer(x, weight, bias, *, context_size, dilation, tile_t=256, tile_co=None):
    """x: (B, T, C_in); weight: (C_out, C_in, K) (PyTorch Conv1d layout); bias: (C_out,)."""
    B, T, C_in = x.shape
    C_out = weight.shape[0]
    K = context_size
    halo = dilation * (K - 1)
    t_out = T - halo
    assert t_out > 0, "sequence too short for this context size / dilation"

    # ---- tile selection (sublane / lane aligned) ----
    h_t = _round_up(halo, 16) if halo > 0 else 16          # halo block rows
    tile_t = min(tile_t, _round_up(t_out, 16))
    tile_t = _round_up(max(tile_t, h_t), h_t)              # multiple of h_t, >= halo
    n_t = pl.cdiv(t_out, tile_t)

    c_out_pad = _round_up(C_out, 128)                      # lane-dense output stores
    if tile_co is None:
        tile_co = 256 if c_out_pad % 256 == 0 else 128
    n_c = c_out_pad // tile_co

    # ---- operand preparation (bf16 operands, f32 accumulation in-kernel) ----
    # Pad T so the halo block of the last tile and the remainder tile are in
    # bounds (extra rows are zeros and the corresponding output rows are cut).
    t_pad = (n_t + 1) * tile_t
    x_bf = jnp.pad(x, ((0, 0), (0, t_pad - T), (0, 0))).astype(jnp.bfloat16)

    # Conv1d weight (C_out, C_in, K) -> im2col layout (K*C_in, C_out_pad).
    w = jnp.transpose(weight, (2, 1, 0)).reshape(K * C_in, C_out)
    w = jnp.pad(w, ((0, 0), (0, c_out_pad - C_out))).astype(jnp.bfloat16)
    b2 = jnp.pad(bias, (0, c_out_pad - C_out)).reshape(1, c_out_pad).astype(jnp.float32)

    kernel = _make_tdnn_kernel(K, dilation, halo)
    halo_step = tile_t // h_t
    out_itemsize = jnp.dtype(x.dtype).itemsize

    # Explicit VMEM budget (double-buffered blocks + in-kernel temporaries),
    # clamped to stay within v7x's 64 MiB physical VMEM with headroom.
    dbl = 2 * (tile_t * C_in * 2 + h_t * C_in * 2 + K * C_in * tile_co * 2
               + tile_co * 4 + tile_t * tile_co * out_itemsize)
    tmp = (tile_t + h_t) * C_in * 2 + tile_t * K * C_in * 2 + tile_t * tile_co * 4
    vmem_limit = int(min(64 * 1024 * 1024, max(32 * 1024 * 1024, 3 * (dbl + tmp))))

    out_padded = pl.pallas_call(
        kernel,
        out_shape=jax.ShapeDtypeStruct((B, n_t * tile_t, c_out_pad), x.dtype),
        grid_spec=pltpu.PrefetchScalarGridSpec(
            num_scalar_prefetch=0,
            grid=(B, n_c, n_t),                   # time innermost: weights stay resident
            in_specs=[
                # current time tile of x
                pl.BlockSpec((None, tile_t, C_in), lambda b, c, t: (b, t, 0)),
                # small aligned halo block starting at (t+1)*tile_t
                pl.BlockSpec((None, h_t, C_in),
                             lambda b, c, t: (b, (t + 1) * halo_step, 0)),
                # im2col weight tile, constant along the time axis
                pl.BlockSpec((K * C_in, tile_co), lambda b, c, t: (0, c)),
                # bias tile, constant along the time axis
                pl.BlockSpec((1, tile_co), lambda b, c, t: (0, c)),
            ],
            out_specs=pl.BlockSpec((None, tile_t, tile_co),
                                   lambda b, c, t: (b, t, c)),
        ),
        compiler_params=pltpu.CompilerParams(
            dimension_semantics=("parallel", "parallel", "parallel"),
            vmem_limit_bytes=vmem_limit,
        ),
    )(x_bf, x_bf, w, b2)

    # Drop time-remainder and channel padding.
    return out_padded[:, :t_out, :C_out]


def tdnn_reference(x, weight, bias, *, context_size, dilation):
    """Pure-JAX reference matching PyTorch Conv1d semantics."""
    B, T, C_in = x.shape
    C_out, _, K = weight.shape
    t_out = T - dilation * (K - 1)
    acc = jnp.broadcast_to(bias.reshape(1, 1, C_out), (B, t_out, C_out)).astype(jnp.float32)
    for k in range(K):
        x_k = x[:, k * dilation:k * dilation + t_out, :]             # (B, T_out, C_in)
        acc = acc + jnp.einsum("btc,oc->bto", x_k, weight[:, :, k],
                               preferred_element_type=jnp.float32)
    return acc.astype(x.dtype)


if __name__ == "__main__":
    # Small shapes consistent with the TDNN forward.
    B, T = 2, 16
    input_dim, output_dim = 32, 64
    context_size, dilation = 3, 2

    key = jax.random.PRNGKey(0)
    kx, kw, kb = jax.random.split(key, 3)
    x = jax.random.normal(kx, (B, T, input_dim), dtype=jnp.float32)
    # Deterministic parameter init (Conv1d weight shape: (C_out, C_in, K)).
    weight = 0.05 * jax.random.normal(kw, (output_dim, input_dim, context_size),
                                      dtype=jnp.float32)
    bias = 0.05 * jax.random.normal(kb, (output_dim,), dtype=jnp.float32)

    out = tdnn_layer(x, weight, bias, context_size=context_size, dilation=dilation)
    out = jax.block_until_ready(out)

    t_out = T - dilation * (context_size - 1)
    assert out.shape == (B, t_out, output_dim), out.shape

    # Tight check against a reference fed the same bf16-rounded operands.
    x_b = x.astype(jnp.bfloat16).astype(jnp.float32)
    w_b = weight.astype(jnp.bfloat16).astype(jnp.float32)
    ref_bf16 = tdnn_reference(x_b, w_b, bias, context_size=context_size, dilation=dilation)
    assert jnp.allclose(out, ref_bf16, atol=2e-3, rtol=2e-3), "mismatch vs bf16 reference"

    # Loose check against the full-f32 Conv1d reference (bf16 rounding only).
    ref_f32 = tdnn_reference(x, weight, bias, context_size=context_size, dilation=dilation)
    assert jnp.allclose(out, ref_f32, atol=5e-2, rtol=5e-2), "mismatch vs f32 reference"

    print("KERNEL_OK")
</pallas_src>

<mosaic_0001>
module attributes {stable_mosaic.version = 11 : i64} {
  func.func @tdnn_kernel(%arg0: i32, %arg1: i32, %arg2: i32, %arg3: memref<1x16x32xbf16, #tpu.memory_space<vmem>>, %arg4: memref<1x16x32xbf16, #tpu.memory_space<vmem>>, %arg5: memref<96x128xbf16, #tpu.memory_space<vmem>>, %arg6: memref<1x128xf32, #tpu.memory_space<vmem>>, %arg7: memref<1x16x128xf32, #tpu.memory_space<vmem>>) attributes {dimension_semantics = [#tpu.dimension_semantics<parallel>, #tpu.dimension_semantics<parallel>, #tpu.dimension_semantics<parallel>], iteration_bounds = array<i64: 2, 1, 1>, scalar_prefetch = 0 : i64, scratch_operands = 0 : i64, tpu.core_type = #tpu.core_type<tc>, window_params = [{transform_indices = @transform_0, window_bounds = array<i64: 1, 16, 32>}, {transform_indices = @transform_1, window_bounds = array<i64: 1, 16, 32>}, {transform_indices = @transform_2, window_bounds = array<i64: 96, 128>}, {transform_indices = @transform_3, window_bounds = array<i64: 1, 128>}, {transform_indices = @transform_4, window_bounds = array<i64: 1, 16, 128>}]} {
    %c0 = arith.constant 0 : index
    %c0_0 = arith.constant 0 : index
    %c0_1 = arith.constant 0 : index
    %0 = vector.load %arg3[%c0, %c0_0, %c0_1] : memref<1x16x32xbf16, #tpu.memory_space<vmem>>, vector<1x16x32xbf16>
    %1 = vector.shape_cast %0 : vector<1x16x32xbf16> to vector<16x32xbf16>
    %c0_2 = arith.constant 0 : index
    %c0_3 = arith.constant 0 : index
    %c0_4 = arith.constant 0 : index
    %2 = vector.load %arg4[%c0_2, %c0_3, %c0_4] : memref<1x16x32xbf16, #tpu.memory_space<vmem>>, vector<1x16x32xbf16>
    %3 = vector.shape_cast %2 : vector<1x16x32xbf16> to vector<16x32xbf16>
    %4 = tpu.concatenate %1, %3 in 0 : vector<16x32xbf16>, vector<16x32xbf16> -> vector<32x32xbf16>
    %5 = vector.extract_strided_slice %4 {offsets = [0, 0], sizes = [16, 32], strides = [1, 1]} : vector<32x32xbf16> to vector<16x32xbf16>
    %6 = vector.extract_strided_slice %4 {offsets = [2, 0], sizes = [16, 32], strides = [1, 1]} : vector<32x32xbf16> to vector<16x32xbf16>
    %7 = vector.extract_strided_slice %4 {offsets = [4, 0], sizes = [16, 32], strides = [1, 1]} : vector<32x32xbf16> to vector<16x32xbf16>
    %8 = tpu.concatenate %5, %6, %7 in 1 : vector<16x32xbf16>, vector<16x32xbf16>, vector<16x32xbf16> -> vector<16x96xbf16>
    %c0_5 = arith.constant 0 : index
    %c0_6 = arith.constant 0 : index
    %9 = vector.load %arg5[%c0_5, %c0_6] : memref<96x128xbf16, #tpu.memory_space<vmem>>, vector<96x128xbf16>
    %cst = arith.constant dense<0.000000e+00> : vector<16x128xf32>
    %10 = tpu.matmul %8, %9, %cst {dimension_numbers = #tpu.dot_dimension_numbers<[1], [0], [0], [1], [0, 0, 1, 1], [], []>} : vector<16x96xbf16>, vector<96x128xbf16>, vector<16x128xf32> -> vector<16x128xf32>
    %c0_7 = arith.constant 0 : index
    %c0_8 = arith.constant 0 : index
    %11 = vector.load %arg6[%c0_7, %c0_8] : memref<1x128xf32, #tpu.memory_space<vmem>>, vector<1x128xf32>
    %12 = vector.broadcast %11 : vector<1x128xf32> to vector<16x128xf32>
    %13 = arith.addf %10, %12 : vector<16x128xf32>
    %c0_9 = arith.constant 0 : index
    %c0_10 = arith.constant 0 : index
    %c0_11 = arith.constant 0 : index
    %14 = vector.load %arg7[%c0_9, %c0_10, %c0_11] : memref<1x16x128xf32, #tpu.memory_space<vmem>>, vector<1x16x128xf32>
    %15 = vector.shape_cast %14 : vector<1x16x128xf32> to vector<16x128xf32>
    %16 = vector.shape_cast %13 : vector<16x128xf32> to vector<1x16x128xf32>
    tpu.vector_store %arg7[%c0_9, %c0_10, %c0_11], %16 {strides = array<i32>} : memref<1x16x128xf32, #tpu.memory_space<vmem>>, vector<1x16x128xf32>,
    return
  }
  func.func @transform_0(%arg0: i32, %arg1: i32, %arg2: i32) -> (i32, i32, i32) {
    %c0_i32 = arith.constant 0 : i32
    %c0_i32_0 = arith.constant 0 : i32
    return %arg0, %arg2, %c0_i32 : i32, i32, i32
  }
  func.func @transform_1(%arg0: i32, %arg1: i32, %arg2: i32) -> (i32, i32, i32) {
    %c1_i32 = arith.constant 1 : i32
    %0 = arith.addi %arg2, %c1_i32 : i32
    %c1_i32_0 = arith.constant 1 : i32
    %1 = arith.muli %0, %c1_i32_0 : i32
    %c0_i32 = arith.constant 0 : i32
    %c0_i32_1 = arith.constant 0 : i32
    return %arg0, %1, %c0_i32 : i32, i32, i32
  }
  func.func @transform_2(%arg0: i32, %arg1: i32, %arg2: i32) -> (i32, i32) {
    %c0_i32 = arith.constant 0 : i32
    %c0_i32_0 = arith.constant 0 : i32
    return %c0_i32, %arg1 : i32, i32
  }
  func.func @transform_3(%arg0: i32, %arg1: i32, %arg2: i32) -> (i32, i32) {
    %c0_i32 = arith.constant 0 : i32
    %c0_i32_0 = arith.constant 0 : i32
    return %c0_i32, %arg1 : i32, i32
  }
  func.func @transform_4(%arg0: i32, %arg1: i32, %arg2: i32) -> (i32, i32, i32) {
    %c0_i32 = arith.constant 0 : i32
    return %arg0, %arg2, %arg1 : i32, i32, i32
  }
}

</mosaic_0001>

<llo_original>
// kernel: tdnn_layer.1
$region0: #{tdnn_layer.1}
  #allocation0 [shape = 'u32[]', space=smem, size = 0x4, offset = 0x4, fixed_abs, tag = 'smem constant byte address 0x4 - core index']
  #allocation1 [shape = 'u32[144,128]{1,0:T(1,128)}', space=vmem, size = 0x12000, scoped, tag = 'internal scratch']
  %s0 = inlined_call_operand.vmem [shape: bf16[2,32,32], index: 0, kind: input, shape index: {}, may-alias: {0,1}]
  %s1 = inlined_call_operand.vmem [shape: bf16[2,32,32], index: 1, kind: input, shape index: {}, may-alias: {0,1}]
  %s2 = inlined_call_operand.vmem [shape: bf16[96,128], index: 2, kind: input, shape index: {}]
  %s3 = inlined_call_operand.vmem [shape: f32[1,128], index: 3, kind: input, shape index: {}]
  %s4 = inlined_call_operand.vmem [shape: f32[2,16,128], index: 4, kind: output, shape index: {}]
  %s5 = sld [smem:[#allocation0]]
  $region49: #{tdnn_layer.1} parent=0
    _
  %s7 = ssub.s32 1, %s5
  %s8 = scalar_select 0, %s7, %s5
  loop: start=0, step=1, limit=4
  $region2: #{tdnn_layer.1} parent=0 // loop_pre_header
    _
  $region3: #{tdnn_layer.1} parent=0 // loop_header
    %s10 = sphi 0, %s14
    %p11 = scmp.ge.s32.totalorder %s10, 4
    %s17 = sphi 0, %s36
    %s18 = sphi 0, %s32
    %s19 = sphi 0, %s28
    %s20 = sphi 0, %s17
    %s21 = sphi 0, %s18
    %s22 = sphi 0, %s19
    %s23 = sphi 0, %s20
    %s24 = sphi 0, %s21
    %s25 = sphi 0, %s22
    %s41 = sphi 0, %s43
    %s44 = sphi 0, %s41
    %s45 = sphi 0, %s44
    %s61 = sphi 0, %s45
    %s71 = sphi 0, %s73
    %s74 = sphi 0, %s71
    %s75 = sphi 0, %s74
    %s91 = sphi 0, %s75
    %s97 = sphi 0, %s99
    %s100 = sphi 0, %s97
    %s101 = sphi 0, %s100
    %s117 = sphi 0, %s101
    %s123 = sphi 0, %s125
    %s126 = sphi 0, %s123
    %s127 = sphi 0, %s126
    %s143 = sphi 0, %s127
    %s153 = sphi 0, %s155
    %s156 = sphi 0, %s153
    %s157 = sphi 0, %s156
    %s173 = sphi 0, %s157
  $region4: #{tdnn_layer.1} parent=0 // loop_header_branch
    %13 = sbr.rel (%p11) target = $region8
  $region5: #{tdnn_layer.1} parent=0 // loop_body
    %s15 = ssub.s32 %s10, 1
    %s16 = ssub.s32 %s10, 2
    %s26 = sadd.s32 1, %s19
    %p27 = scmp.ge.s32.totalorder %s26, 1
    %s28 = scalar_select %p27, 0, %s26
    %s29 = sadd.s32 1, %s18
    %s30 = scalar_select %p27, %s29, %s18
    %p31 = scmp.ge.s32.totalorder %s30, 1
    %s32 = scalar_select %p31, 0, %s30
    %s33 = sadd.s32 1, %s17
    %s34 = scalar_select %p31, %s33, %s17
    %p35 = scmp.ge.s32.totalorder %s34, 2
    %s36 = scalar_select %p35, 0, %s34
    %s37 = ssub.s32 %s17, %s36
    %s38 = ssub.s32 %s19, %s28
    %s39 = sor.u32 %s37, %s38
    %p40 = scmp.eq.s32.totalorder %s39, 0
    %s42 = sadd.s32 %s41, 1
    %s43 = scalar_select %p40, %s41, %s42
    %p46 = pneg %p40
    %p47 = scmp.eq.s32.totalorder %s10, 1
    %p48 = por %p46, %p47
    %p49 = scmp.ne.s32.totalorder %s41, %s44
    %p50 = scmp.eq.s32.totalorder %s10, 0
    %p51 = por %p49, %p50
    %p52 = scmp.ne.s32.totalorder %s41, %s44
    %p53 = scmp.eq.s32.totalorder %s15, 1
    %p54 = por %p52, %p53
    %p55 = scmp.ne.s32.totalorder %s44, %s45
    %p56 = scmp.eq.s32.totalorder %s15, 0
    %p57 = por %p55, %p56
    %p58 = scmp.ne.s32.totalorder %s44, %s45
    %p59 = scmp.eq.s32.totalorder %s16, 1
    %p60 = por %p58, %p59
    %p62 = scmp.ne.s32.totalorder %s45, %s61
    %p63 = scmp.eq.s32.totalorder %s16, 0
    %p64 = por %p62, %p63
    %s65 = sadd.s32 %s19, 1
    %s66 = sadd.s32 %s28, 1
    %s67 = ssub.s32 %s17, %s36
    %s68 = ssub.s32 %s65, %s66
    %s69 = sor.u32 %s67, %s68
    %p70 = scmp.eq.s32.totalorder %s69, 0
    %s72 = sadd.s32 %s71, 1
    %s73 = scalar_select %p70, %s71, %s72
    %p76 = pneg %p70
    %p77 = scmp.eq.s32.totalorder %s10, 1
    %p78 = por %p76, %p77
    %p79 = scmp.ne.s32.totalorder %s71, %s74
    %p80 = scmp.eq.s32.totalorder %s10, 0
    %p81 = por %p79, %p80
    %p82 = scmp.ne.s32.totalorder %s71, %s74
    %p83 = scmp.eq.s32.totalorder %s15, 1
    %p84 = por %p82, %p83
    %p85 = scmp.ne.s32.totalorder %s74, %s75
    %p86 = scmp.eq.s32.totalorder %s15, 0
    %p87 = por %p85, %p86
    %p88 = scmp.ne.s32.totalorder %s74, %s75
    %p89 = scmp.eq.s32.totalorder %s16, 1
    %p90 = por %p88, %p89
    %p92 = scmp.ne.s32.totalorder %s75, %s91
    %p93 = scmp.eq.s32.totalorder %s16, 0
    %p94 = por %p92, %p93
    %s95 = ssub.s32 %s18, %s32
    %p96 = scmp.eq.s32.totalorder %s95, 0
    %s98 = sadd.s32 %s97, 1
    %s99 = scalar_select %p96, %s97, %s98
    %p102 = pneg %p96
    %p103 = scmp.eq.s32.totalorder %s10, 1
    %p104 = por %p102, %p103
    %p105 = scmp.ne.s32.totalorder %s97, %s100
    %p106 = scmp.eq.s32.totalorder %s10, 0
    %p107 = por %p105, %p106
    %p108 = scmp.ne.s32.totalorder %s97, %s100
    %p109 = scmp.eq.s32.totalorder %s15, 1
    %p110 = por %p108, %p109
    %p111 = scmp.ne.s32.totalorder %s100, %s101
    %p112 = scmp.eq.s32.totalorder %s15, 0
    %p113 = por %p111, %p112
    %p114 = scmp.ne.s32.totalorder %s100, %s101
    %p115 = scmp.eq.s32.totalorder %s16, 1
    %p116 = por %p114, %p115
    %p118 = scmp.ne.s32.totalorder %s101, %s117
    %p119 = scmp.eq.s32.totalorder %s16, 0
    %p120 = por %p118, %p119
    %s121 = ssub.s32 %s18, %s32
    %p122 = scmp.eq.s32.totalorder %s121, 0
    %s124 = sadd.s32 %s123, 1
    %s125 = scalar_select %p122, %s123, %s124
    %p128 = pneg %p122
    %p129 = scmp.eq.s32.totalorder %s10, 1
    %p130 = por %p128, %p129
    %p131 = scmp.ne.s32.totalorder %s123, %s126
    %p132 = scmp.eq.s32.totalorder %s10, 0
    %p133 = por %p131, %p132
    %p134 = scmp.ne.s32.totalorder %s123, %s126
    %p135 = scmp.eq.s32.totalorder %s15, 1
    %p136 = por %p134, %p135
    %p137 = scmp.ne.s32.totalorder %s126, %s127
    %p138 = scmp.eq.s32.totalorder %s15, 0
    %p139 = por %p137, %p138
    %p140 = scmp.ne.s32.totalorder %s126, %s127
    %p141 = scmp.eq.s32.totalorder %s16, 1
    %p142 = por %p140, %p141
    %p144 = scmp.ne.s32.totalorder %s127, %s143
    %p145 = scmp.eq.s32.totalorder %s16, 0
    %p146 = por %p144, %p145
    %s147 = ssub.s32 %s17, %s36
    %s148 = ssub.s32 %s19, %s28
    %s149 = sor.u32 %s147, %s148
    %s150 = ssub.s32 %s18, %s32
    %s151 = sor.u32 %s149, %s150
    %p152 = scmp.eq.s32.totalorder %s151, 0
    %s154 = sadd.s32 %s153, 1
    %s155 = scalar_select %p152, %s153, %s154
    %p158 = pneg %p152
    %p159 = scmp.eq.s32.totalorder %s10, 1
    %p160 = por %p158, %p159
    %p161 = scmp.ne.s32.totalorder %s153, %s156
    %p162 = scmp.eq.s32.totalorder %s10, 0
    %p163 = por %p161, %p162
    %p164 = scmp.ne.s32.totalorder %s153, %s156
    %p165 = scmp.eq.s32.totalorder %s15, 1
    %p166 = por %p164, %p165
    %p167 = scmp.ne.s32.totalorder %s156, %s157
    %p168 = scmp.eq.s32.totalorder %s15, 0
    %p169 = por %p167, %p168
    %p170 = scmp.ne.s32.totalorder %s156, %s157
    %p171 = scmp.eq.s32.totalorder %s16, 1
    %p172 = por %p170, %p171
    %p174 = scmp.ne.s32.totalorder %s157, %s173
    %p175 = scmp.eq.s32.totalorder %s16, 0
    %p176 = por %p174, %p175
    %p177 = scmp.le.s32.totalorder 1, %s10
    %p178 = scmp.lt.s32.totalorder %s10, 3
    %p179 = pnand %p177, %p178
    %p180 = pneg %p179
    // Predicated region
    $region9: #{tdnn_layer.1} parent=5 // pred_check
      _
    $region10: #{tdnn_layer.1} parent=5 // pred_check_branch
      %182 = sbr.rel (%p179) target = $region12
    $region11: #{tdnn_layer.1} parent=5 // pred_region
      %s183 = ssub.s32 %s10, 1
      // Predicated region
      $region13: #{tdnn_layer.1} parent=11 // pred_check
        %p184 = pneg %p113
      $region14: #{tdnn_layer.1} parent=11 // pred_check_branch
        %186 = sbr.rel (%p184) target = $region16
      $region15: #{tdnn_layer.1} parent=11 // pred_region
        %p187 = scmp.lt.s32.totalorder %s21, 0
        %s188 = scalar_select %p187, %s21, 0
        %s189 = smul.addr %s188, 4
        %s190 = scalar_lea.vmem %s2, %s189
      $region16: #{tdnn_layer.1} parent=11 // pred_fallthru
        _
      // Predicated region
      $region17: #{tdnn_layer.1} parent=11 // pred_check
        %p191 = pneg %p139
      $region18: #{tdnn_layer.1} parent=11 // pred_check_branch
        %193 = sbr.rel (%p191) target = $region20
      $region19: #{tdnn_layer.1} parent=11 // pred_region
        %p194 = scmp.lt.s32.totalorder %s21, 0
        %s195 = scalar_select %p194, %s21, 0
        %s196 = scalar_lea.vmem %s3, %s195
      $region20: #{tdnn_layer.1} parent=11 // pred_fallthru
        _
    $region12: #{tdnn_layer.1} parent=5 // pred_fallthru
      _
    %p197 = scmp.lt.s32.totalorder %s10, 2
    // Predicated region
    $region21: #{tdnn_layer.1} parent=5 // pred_check
      %p198 = pneg %p197
    $region22: #{tdnn_layer.1} parent=5 // pred_check_branch
      %200 = sbr.rel (%p198) target = $region24
    $region23: #{tdnn_layer.1} parent=5 // pred_region
      // Predicated region
      $region25: #{tdnn_layer.1} parent=23 // pred_check
        %p201 = pneg %p51
      $region26: #{tdnn_layer.1} parent=23 // pred_check_branch
        %203 = sbr.rel (%p201) target = $region28
      $region27: #{tdnn_layer.1} parent=23 // pred_region
        %s204 = smul.u32 2, %s19
        %p205 = scmp.lt.s32.totalorder %s17, 1
        %s206 = scalar_select %p205, %s17, 1
        %p207 = scmp.lt.s32.totalorder %s204, 3
        %s208 = scalar_select %p207, %s204, 3
        %s209 = smul.addr %s206, 4
        %s210 = sadd.s32 %s208, %s209
        %s211 = smul.addr %s210, 4
        %s212 = scalar_lea.vmem %s0, %s211
        %s213 = smul.u32 2, %s19
      $region28: #{tdnn_layer.1} parent=23 // pred_fallthru
        _
      // Predicated region
      $region29: #{tdnn_layer.1} parent=23 // pred_check
        %p214 = pneg %p81
      $region30: #{tdnn_layer.1} parent=23 // pred_check_branch
        %216 = sbr.rel (%p214) target = $region32
      $region31: #{tdnn_layer.1} parent=23 // pred_region
        %s217 = sadd.s32 %s19, 1
        %s218 = smul.u32 2, %s217
        %p219 = scmp.lt.s32.totalorder %s17, 1
        %s220 = scalar_select %p219, %s17, 1
        %p221 = scmp.lt.s32.totalorder %s218, 3
        %s222 = scalar_select %p221, %s218, 3
        %s223 = smul.addr %s220, 4
        %s224 = sadd.s32 %s222, %s223
        %s225 = smul.addr %s224, 4
        %s226 = scalar_lea.vmem %s1, %s225
        %s227 = sadd.s32 %s19, 1
        %s228 = smul.u32 2, %s227
      $region32: #{tdnn_layer.1} parent=23 // pred_fallthru
        _
    $region24: #{tdnn_layer.1} parent=5 // pred_fallthru
      _
    %p229 = scmp.le.s32.totalorder 1, %s10
    %p230 = scmp.lt.s32.totalorder %s10, 3
    %p231 = pnand %p229, %p230
    %p232 = pneg %p231
    // Predicated region
    $region33: #{tdnn_layer.1} parent=5 // pred_check
      _
    $region34: #{tdnn_layer.1} parent=5 // pred_check_branch
      %234 = sbr.rel (%p231) target = $region36
    $region35: #{tdnn_layer.1} parent=5 // pred_region
      %s235 = ssub.s32 %s10, 1
      %s236 = smul.u32 2, %s22
      %p237 = scmp.lt.s32.totalorder %s20, 1
      %s238 = scalar_select %p237, %s20, 1
      %p239 = scmp.lt.s32.totalorder %s236, 3
      %s240 = scalar_select %p239, %s236, 3
      %s241 = smul.addr %s238, 4
      %s242 = sadd.s32 %s240, %s241
      %s243 = smul.addr %s242, 4
      %s244 = scalar_lea.vmem %s0, %s243
      %p245 = pneg %p57
      %p246 = pneg %p54
      %s247 = sadd.s32 %s22, 1
      %s248 = smul.u32 2, %s247
      %p249 = scmp.lt.s32.totalorder %s20, 1
      %s250 = scalar_select %p249, %s20, 1
      %p251 = scmp.lt.s32.totalorder %s248, 3
      %s252 = scalar_select %p251, %s248, 3
      %s253 = smul.addr %s250, 4
      %s254 = sadd.s32 %s252, %s253
      %s255 = smul.addr %s254, 4
      %s256 = scalar_lea.vmem %s1, %s255
      %p257 = pneg %p87
      %p258 = pneg %p84
      %p259 = scmp.lt.s32.totalorder %s21, 0
      %s260 = scalar_select %p259, %s21, 0
      %s261 = smul.addr %s260, 4
      %s262 = scalar_lea.vmem %s2, %s261
      %p263 = pneg %p113
      %p264 = pneg %p110
      %p265 = scmp.lt.s32.totalorder %s21, 0
      %s266 = scalar_select %p265, %s21, 0
      %s267 = scalar_lea.vmem %s3, %s266
      %p268 = pneg %p139
      %p269 = pneg %p136
      %p270 = pneg %p169
      %p271 = pneg %p166
      %s272 = smul.u32 2, %s22
      %p273 = scmp.lt.s32.totalorder %s20, 1
      %s274 = scalar_select %p273, %s20, 1
      %p275 = scmp.lt.s32.totalorder %s272, 1
      %s276 = scalar_select %p275, %s272, 1
      %p277 = scmp.lt.s32.totalorder %s21, 0
      %s278 = scalar_select %p277, %s21, 0
      %s279 = sadd.s32 %s278, %s276
      %s280 = smul.addr %s274, 2
      %s281 = sadd.s32 %s279, %s280
      %s282 = smul.addr %s281, 8
      %s283 = scalar_lea.vmem %s4, %s282
      %s284 = smul.u32 2, %s22
      %p285 = scmp.lt.s32.totalorder %s20, 1
      %s286 = scalar_select %p285, %s20, 1
      %p287 = scmp.lt.s32.totalorder %s284, 3
      %s288 = scalar_select %p287, %s284, 3
      %s289 = smul.addr %s286, 4
      %s290 = sadd.s32 %s288, %s289
      %s291 = smul.addr %s290, 4
      %s292 = scalar_lea.vmem %s0, %s291
      %s293 = smul.u32 2, %s22
      %s294 = sadd.s32 %s22, 1
      %s295 = smul.u32 2, %s294
      %p296 = scmp.lt.s32.totalorder %s20, 1
      %s297 = scalar_select %p296, %s20, 1
      %p298 = scmp.lt.s32.totalorder %s295, 3
      %s299 = scalar_select %p298, %s295, 3
      %s300 = smul.addr %s297, 4
      %s301 = sadd.s32 %s299, %s300
      %s302 = smul.addr %s301, 4
      %s303 = scalar_lea.vmem %s1, %s302
      %s304 = sadd.s32 %s22, 1
      %s305 = smul.u32 2, %s304
      %p306 = scmp.lt.s32.totalorder %s21, 0
      %s307 = scalar_select %p306, %s21, 0
      %s308 = smul.addr %s307, 4
      %s309 = scalar_lea.vmem %s2, %s308
      %p310 = scmp.lt.s32.totalorder %s21, 0
      %s311 = scalar_select %p310, %s21, 0
      %s312 = scalar_lea.vmem %s3, %s311
      %s313 = smul.u32 2, %s22
      %p314 = scmp.lt.s32.totalorder %s20, 1
      %s315 = scalar_select %p314, %s20, 1
      %p316 = scmp.lt.s32.totalorder %s313, 1
      %s317 = scalar_select %p316, %s313, 1
      %p318 = scmp.lt.s32.totalorder %s21, 0
      %s319 = scalar_select %p318, %s21, 0
      %s320 = sadd.s32 %s319, %s317
      %s321 = smul.addr %s315, 2
      %s322 = sadd.s32 %s320, %s321
      %s323 = smul.addr %s322, 8
      %s324 = scalar_lea.vmem %s4, %s323
      %s325 = smul.u32 2, %s22
      %v327 = vld [vmem:[%s292] sm:$0xf]
      %v328 = vld [vmem:[%s292 + $0x4] sm:$0xf]
      %v329 = vld [vmem:[%s303] sm:$0xf]
      %v330 = vld [vmem:[%s303 + $0x4] sm:$0xf]
      %v333 = vunpack.c.l.b16 %v327
      %v334 = vunpack.c.l.b16 %v328
      %v335 = vpack.c.b16 %v334, %v333
      %v338 = vunpack.c.l.b16 %v329
      %v339 = vunpack.c.l.b16 %v330
      %v340 = vpack.c.b16 %v339, %v338
      %vm341 = vcmask 1046528
      %v342 = vrot.slane %v335, 1
      %v343 = vrot.slane %v340, 1
      %v344 = vsel %vm341, %v342, %v343
      %345 = vrot.lane.b32.xlu0 %v344, 32
      %v346 = vpop.permute.xlu0 %345
      %vm347 = vcmask 1045504
      %v348 = vrot.slane %v335, 2
      %v349 = vrot.slane %v340, 2
      %v350 = vsel %vm347, %v348, %v349
      %351 = vrot.lane.b32.xlu0 %v350, 64
      %v352 = vpop.permute.xlu0 %351
      %vm353 = vcmask 261120
      %v356 = vsel %vm353, %v335, %v346
      %vm357 = vcmask 523264
      %v359 = vsel %vm357, %v356, %v352
      %v360 = vld [vmem:[%s309] sm:$0xf]
      %v361 = vld [vmem:[%s309 + $0x4] sm:$0xf]
      %v362 = vld [vmem:[%s309 + $0x8] sm:$0xf]
      %v363 = vld [vmem:[%s309 + $0xc] sm:$0xf]
      %v364 = vld [vmem:[%s309 + $0x10] sm:$0xf]
      %v365 = vld [vmem:[%s309 + $0x14] sm:$0xf]
      %v366 = vld [vmem:[%s309 + $0x18] sm:$0xf]
      %v367 = vld [vmem:[%s309 + $0x1c] sm:$0xf]
      %v368 = vld [vmem:[%s309 + $0x20] sm:$0xf]
      %v369 = vld [vmem:[%s309 + $0x24] sm:$0xf]
      %v370 = vld [vmem:[%s309 + $0x28] sm:$0xf]
      %v371 = vld [vmem:[%s309 + $0x2c] sm:$0xf]
      %v372 = vld [vmem:[%s312] sm:$0x1]
      %v374 = vlaneseq
      %v375 = vshrl.u32 %v374, 7
      %v376 = vsub.s32 0, %v375
      %v377 = vrot.slane %v372, %v376
      %v391 = vunpack.c.l.b16 %v360
      %v392 = vunpack.c.l.b16 %v361
      %v393 = vunpack.c.l.b16 %v362
      %v394 = vunpack.c.l.b16 %v363
      %v395 = vunpack.c.l.b16 %v364
      %v396 = vunpack.c.l.b16 %v365
      %v397 = vunpack.c.l.b16 %v366
      %v398 = vunpack.c.l.b16 %v367
      %v399 = vunpack.c.l.b16 %v368
      %v400 = vunpack.c.l.b16 %v369
      %v401 = vunpack.c.l.b16 %v370
      %v402 = vunpack.c.l.b16 %v371
      %v403 = vpack.c.b16 %v392, %v391
      %v404 = vpack.c.b16 %v394, %v393
      %v405 = vpack.c.b16 %v396, %v395
      %v406 = vpack.c.b16 %v398, %v397
      %v407 = vpack.c.b16 %v400, %v399
      %v408 = vpack.c.b16 %v402, %v401
      %vm415 = vcmask 785408
      %v416 = vsel %vm415, %v359, 0
      %418 = vmatprep.subr.bf16.mxu0 0
      %419 = vmatpush1.bf16.msra.mxu0 %v403
      %420 = vmatprep.subr.bf16.mxu0 0
      %421 = vmatpush1.bf16.msra.mxu0 %v404
      %422 = vmatprep.subr.bf16.mxu0 0
      %423 = vmatpush1.bf16.msra.mxu0 %v405
      %424 = vmatprep.subr.bf16.mxu0 0
      %425 = vmatpush1.bf16.msra.mxu0 %v406
      %426 = vmatprep.subr.bf16.mxu0 0
      %427 = vmatpush1.bf16.msra.mxu0 %v407
      %428 = vmatprep.subr.bf16.mxu0 0
      %429 = vmatpush1.bf16.msra.mxu0 %v408
      %430 = vmatprep.subr.bf16.mxu0 0
      %431 = vmatpush1.bf16.msra.mxu0 0
      %432 = vmatprep.subr.bf16.mxu0 0
      %433 = vmatpush1.bf16.msra.mxu0 0
      %434 = vmatprep.subr.bf16.mxu0 0
      %435 = vmatpush1.bf16.msra.mxu0 0
      %436 = vmatprep.subr.bf16.mxu0 0
      %437 = vmatpush1.bf16.msra.mxu0 0
      %438 = vmatprep.subr.bf16.mxu0 0
      %439 = vmatpush1.bf16.msra.mxu0 0
      %440 = vmatprep.subr.bf16.mxu0 0
      %441 = vmatpush1.bf16.msra.mxu0 0
      %442 = vmatprep.subr.bf16.mxu0 0
      %443 = vmatpush1.bf16.msra.mxu0 0
      %444 = vmatprep.subr.bf16.mxu0 0
      %445 = vmatpush1.bf16.msra.mxu0 0
      %446 = vmatprep.subr.bf16.mxu0 0
      %447 = vmatpush1.bf16.msra.mxu0 0
      %448 = vmatprep.subr.bf16.mxu0 0
      %449 = vmatpush1.bf16.msra.mxu0 0
      %450 = vmatprep.mubr.bf16.mxu0 0
      %451 = vmatmul.mubr.bf16.gmra.mrb[0].mxu0 %v416
      %v452 = vpop.f32.mrb[0].mxu0
      %v453 = vadd.f32 %v377, %v452
      %v454 = vpop.f32.mrb[0].mxu0
      %v455 = vpop.f32.mrb[0].mxu0
      %v456 = vadd.f32 %v377, %v455
      %v457 = vpop.f32.mrb[0].mxu0
      %458 = vdwg.mxu0
      %459 = vst [vmem:[%s324] sm:$0xff] %v453
      %460 = vst [vmem:[%s324 + $0x8] sm:$0xff] %v456
      %s461 = smul.u32 2, %s22
      %p462 = scmp.lt.s32.totalorder %s20, 1
      %s463 = scalar_select %p462, %s20, 1
      %p464 = scmp.lt.s32.totalorder %s461, 1
      %s465 = scalar_select %p464, %s461, 1
      %p466 = scmp.lt.s32.totalorder %s21, 0
      %s467 = scalar_select %p466, %s21, 0
      %s468 = sadd.s32 %s467, %s465
      %s469 = smul.addr %s463, 2
      %s470 = sadd.s32 %s468, %s469
      %s471 = smul.addr %s470, 8
      %s472 = scalar_lea.vmem %s4, %s471
      // Predicated region
      $region37: #{tdnn_layer.1} parent=35 // pred_check
        %p473 = pneg %p166
      $region38: #{tdnn_layer.1} parent=35 // pred_check_branch
        %475 = sbr.rel (%p473) target = $region40
      $region39: #{tdnn_layer.1} parent=35 // pred_region
        %s476 = smul.u32 2, %s22
      $region40: #{tdnn_layer.1} parent=35 // pred_fallthru
        _
    $region36: #{tdnn_layer.1} parent=5 // pred_fallthru
      _
    %p477 = scmp.le.s32.totalorder 2, %s10
    // Predicated region
    $region41: #{tdnn_layer.1} parent=5 // pred_check
      %p478 = pneg %p477
    $region42: #{tdnn_layer.1} parent=5 // pred_check_branch
      %480 = sbr.rel (%p478) target = $region44
    $region43: #{tdnn_layer.1} parent=5 // pred_region
      %s481 = ssub.s32 %s10, 2
      // Predicated region
      $region45: #{tdnn_layer.1} parent=43 // pred_check
        %p482 = pneg %p172
      $region46: #{tdnn_layer.1} parent=43 // pred_check_branch
        %484 = sbr.rel (%p482) target = $region48
      $region47: #{tdnn_layer.1} parent=43 // pred_region
        %s485 = smul.u32 2, %s25
        %p486 = scmp.lt.s32.totalorder %s23, 1
        %s487 = scalar_select %p486, %s23, 1
        %p488 = scmp.lt.s32.totalorder %s485, 1
        %s489 = scalar_select %p488, %s485, 1
        %p490 = scmp.lt.s32.totalorder %s24, 0
        %s491 = scalar_select %p490, %s24, 0
        %s492 = sadd.s32 %s491, %s489
        %s493 = smul.addr %s487, 2
        %s494 = sadd.s32 %s492, %s493
        %s495 = smul.addr %s494, 8
        %s496 = scalar_lea.vmem %s4, %s495
      $region48: #{tdnn_layer.1} parent=43 // pred_fallthru
        _
    $region44: #{tdnn_layer.1} parent=5 // pred_fallthru
      _
  $region6: #{tdnn_layer.1} parent=0 // loop_footer
    %s14 = sadd.s32 1, %s10
  $region7: #{tdnn_layer.1} parent=0 // loop_footer_branch
    %9 = sbr.rel target = $region3
  $region8: #{tdnn_layer.1} parent=0 // loop_exit
    _

</llo_original>
